<compile_context>
chip_gen: v7x
topology: tpu7x:2x2x1
jax: 0.10.0
libtpu: 0.0.40
codegen_flags: <defaults>
</compile_context>

<pallas_src>
import functools

import jax
import jax.numpy as jnp
from jax.experimental import pallas as pl
from jax.experimental.pallas import tpu as pltpu


def _round_up(x, m):
    return (x + m - 1) // m * m


# ---------------------------------------------------------------------------
# Kernel 1: out = [relu](x) @ W + bias [+ residual]   (M-tiled)
# ---------------------------------------------------------------------------
def _mm_kernel(x_ref, w_ref, b_ref, *rest, relu_input, has_residual, mxu_dtype):
    if has_residual:
        res_ref, o_ref = rest
    else:
        (o_ref,) = rest
    x = x_ref[...]
    if relu_input:
        # ReLU commutes with zero-padded patch extraction (relu(0) == 0).
        x = jnp.maximum(x, 0.0)
    y = jnp.dot(x.astype(mxu_dtype), w_ref[...].astype(mxu_dtype),
                preferred_element_type=jnp.float32)
    y = y + b_ref[...]
    if has_residual:
        y = y + res_ref[...]
    o_ref[...] = y.astype(o_ref.dtype)


def _matmul_bias(x2d, w2d, b, *, residual=None, relu_input=False,
                 mxu_dtype=jnp.float32, tile_m=512):
    """out = [relu](x2d) @ w2d + b [+ residual], tiled over rows of x2d."""
    m, k = x2d.shape
    cout = w2d.shape[1]
    bm = b.reshape(1, cout)
    itemsize = jnp.dtype(x2d.dtype).itemsize

    # Row-tile: large enough to hide the ~0.35us per-grid-step cost, small
    # enough that 2x double-buffered (input + residual + output) blocks stay
    # well under v7x's 64 MiB VMEM (v5e/v6e have 128 MiB and could go larger).
    tm = min(tile_m, _round_up(m, 8))
    budget = 16 * 1024 * 1024
    while tm > 8 and 2 * tm * (k + 2 * cout) * itemsize > budget:
        tm //= 2
    tm = max(8, (tm // 8) * 8)

    m_pad = _round_up(m, tm)
    if m_pad != m:  # zero rows are harmless to the dot; sliced off below.
        x2d = jnp.pad(x2d, ((0, m_pad - m), (0, 0)))
        if residual is not None:
            residual = jnp.pad(residual, ((0, m_pad - m), (0, 0)))

    grid = (m_pad // tm,)
    inputs = [x2d, w2d, bm]
    in_specs = [
        pl.BlockSpec((tm, k), lambda i: (i, 0)),      # activation rows: tiled
        pl.BlockSpec((k, cout), lambda i: (0, 0)),    # weights: resident
        pl.BlockSpec((1, cout), lambda i: (0, 0)),    # bias: resident
    ]
    has_residual = residual is not None
    if has_residual:
        inputs.append(residual)
        in_specs.append(pl.BlockSpec((tm, cout), lambda i: (i, 0)))

    kernel = functools.partial(_mm_kernel, relu_input=relu_input,
                               has_residual=has_residual, mxu_dtype=mxu_dtype)
    # Shard row tiles across TensorCores (v7x megacore); single-tile launches
    # stay "arbitrary" so the tiny P5/P6/P7 convs are not split for nothing.
    semantics = ("parallel",) if grid[0] > 1 else ("arbitrary",)

    out = pl.pallas_call(
        kernel,
        out_shape=jax.ShapeDtypeStruct((m_pad, cout), x2d.dtype),
        grid=grid,
        in_specs=in_specs,
        out_specs=pl.BlockSpec((tm, cout), lambda i: (i, 0)),
        compiler_params=pltpu.CompilerParams(dimension_semantics=semantics),
    )(*inputs)
    return out[:m] if m_pad != m else out


# ---------------------------------------------------------------------------
# Kernel 2: direct 3x3 stride-1 "same" conv — 9 shifted matmuls, no HBM im2col
# ---------------------------------------------------------------------------
def _conv3x3_kernel(x_ref, w_ref, b_ref, o_ref, *, m_out, wp, mxu_dtype):
    cout = o_ref.shape[-1]
    acc = jnp.zeros((m_out, cout), jnp.float32)
    for ky in range(3):
        for kx in range(3):
            # Tap (ky,kx) of the flattened padded image is a contiguous row
            # slice at static offset ky*Wp + kx.
            xs = x_ref[0, pl.ds(ky * wp + kx, m_out), :].astype(mxu_dtype)
            wt = w_ref[ky * 3 + kx].astype(mxu_dtype)
            acc = acc + jnp.dot(xs, wt, preferred_element_type=jnp.float32)
    acc = acc + b_ref[...]
    o_ref[0] = acc.astype(o_ref.dtype)


def conv3x3_same_pallas(x, w, b, *, mxu_dtype=jnp.float32):
    """3x3, stride 1, padding 1 conv.  Input NHWC, weight (3,3,Cin,Cout)."""
    n, h, wd, cin = x.shape
    cout = w.shape[-1]
    hp, wp = h + 2, wd + 2
    xp = jnp.pad(x, ((0, 0), (1, 1), (1, 1), (0, 0)))      # 1-pixel halo
    xf = xp.reshape(n, hp * wp, cin)                        # flatten spatial
    # Compute one flat output per padded column too (Wp per row); the 2 extra
    # "wrap-around" columns per row are junk and get sliced off afterwards.
    m_out = h * wp
    mp = _round_up(hp * wp + 2, 8)        # tail pad keeps the last taps in-bounds
    if mp > hp * wp:
        xf = jnp.pad(xf, ((0, 0), (0, mp - hp * wp), (0, 0)))
    wf = w.reshape(9, cin, cout)
    bm = b.reshape(1, cout)

    kernel = functools.partial(_conv3x3_kernel, m_out=m_out, wp=wp,
                               mxu_dtype=mxu_dtype)
    out = pl.pallas_call(
        kernel,
        out_shape=jax.ShapeDtypeStruct((n, m_out, cout), x.dtype),
        grid=(n,),
        in_specs=[
            pl.BlockSpec((1, mp, cin), lambda i: (i, 0, 0)),    # one image / step
            pl.BlockSpec((9, cin, cout), lambda i: (0, 0, 0)),  # weights resident
            pl.BlockSpec((1, cout), lambda i: (0, 0)),          # bias resident
        ],
        out_specs=pl.BlockSpec((1, m_out, cout), lambda i: (i, 0, 0)),
        compiler_params=pltpu.CompilerParams(dimension_semantics=("parallel",)),
    )(xf, wf, bm)
    # Drop the 2 wrap-around columns per row introduced by the flat layout.
    return out.reshape(n, h, wp, cout)[:, :, :wd, :]


# ---------------------------------------------------------------------------
# Conv wrappers (glue is index/reshape only)
# ---------------------------------------------------------------------------
def conv1x1_pallas(x, w, b, *, residual=None, mxu_dtype=jnp.float32, tile_m=512):
    n, h, wd, cin = x.shape
    cout = w.shape[-1]
    x2 = x.reshape(n * h * wd, cin)
    r2 = None if residual is None else residual.reshape(n * h * wd, cout)
    out = _matmul_bias(x2, w.reshape(cin, cout), b, residual=r2,
                       mxu_dtype=mxu_dtype, tile_m=tile_m)
    return out.reshape(n, h, wd, cout)


def _im2col(x, ksize, stride, padding):
    n, h, w, c = x.shape
    xp = jnp.pad(x, ((0, 0), (padding, padding), (padding, padding), (0, 0)))
    ho = (h + 2 * padding - ksize) // stride + 1
    wo = (w + 2 * padding - ksize) // stride + 1
    taps = []
    for ky in range(ksize):
        for kx in range(ksize):
            taps.append(
                xp[:, ky:ky + stride * ho:stride, kx:kx + stride * wo:stride, :])
    cols = jnp.stack(taps, axis=3)                        # (N, Ho, Wo, K*K, C)
    cols = cols.reshape(n * ho * wo, ksize * ksize * c)   # (M, K*K*C)
    return cols, (n, ho, wo)


def conv3x3_s2_pallas(x, w, b, *, relu_input=False, mxu_dtype=jnp.float32):
    """3x3, stride 2, padding 1 conv (tiny P6/P7 heads): im2col + one matmul."""
    cols, (n, ho, wo) = _im2col(x, 3, 2, 1)
    cout = w.shape[-1]
    out = _matmul_bias(cols, w.reshape(9 * w.shape[2], cout), b,
                       relu_input=relu_input, mxu_dtype=mxu_dtype)
    return out.reshape(n, ho, wo, cout)


# ---------------------------------------------------------------------------
# Nearest-neighbour resize, matches F.interpolate(mode='nearest')
# ---------------------------------------------------------------------------
def _nearest_resize(x, out_h, out_w):
    n, h, w, c = x.shape
    if out_h % h == 0 and out_w % w == 0:
        # Exact integer factor (the common FPN 2x case): broadcast+reshape —
        # no XLA gather, fuses into the downstream pad/copy.  Output pixel
        # (yo, xo) takes source (yo // fh, xo // fw), identical to the
        # floor(dst*in/out) rule below.
        fh, fw = out_h // h, out_w // w
        xb = jnp.broadcast_to(x[:, :, None, :, None, :], (n, h, fh, w, fw, c))
        return xb.reshape(n, out_h, out_w, c)
    rows = (jnp.arange(out_h) * h) // out_h   # floor(dst * in / out)
    cols = (jnp.arange(out_w) * w) // out_w
    return x[:, rows][:, :, cols]


# ---------------------------------------------------------------------------
# Deterministic parameter init (shapes from RetinaFPN.__init__)
# ---------------------------------------------------------------------------
def init_params(key, c3_in, c4_in, c5_in, planes, use_p5=True):
    layers = {
        "P3_1": (1, c3_in), "P3_2": (3, planes),
        "P4_1": (1, c4_in), "P4_2": (3, planes),
        "P5_1": (1, c5_in), "P5_2": (3, planes),
        "P6":   (3, planes if use_p5 else c5_in),
        "P7":   (3, planes),
    }
    params = {}
    for name, (k, cin) in layers.items():
        key, kw, kb = jax.random.split(key, 3)
        params[name + "_w"] = 0.1 * jax.random.normal(
            kw, (k, k, cin, planes), jnp.float32)
        params[name + "_b"] = 0.01 * jax.random.normal(
            kb, (planes,), jnp.float32)
    return params


# ---------------------------------------------------------------------------
# RetinaFPN forward (same op ordering / semantics as the PyTorch module)
# ---------------------------------------------------------------------------
def retina_fpn_forward(params, inputs, use_p5=True, mxu_dtype=jnp.float32):
    C3, C4, C5 = inputs

    # Laterals (1x1 convs); top-down nearest-upsample adds fused as residuals.
    P5 = conv1x1_pallas(C5, params["P5_1_w"], params["P5_1_b"], mxu_dtype=mxu_dtype)
    up5 = _nearest_resize(P5, C4.shape[1], C4.shape[2])
    P4 = conv1x1_pallas(C4, params["P4_1_w"], params["P4_1_b"],
                        residual=up5, mxu_dtype=mxu_dtype)
    up4 = _nearest_resize(P4, C3.shape[1], C3.shape[2])
    P3 = conv1x1_pallas(C3, params["P3_1_w"], params["P3_1_b"],
                        residual=up4, mxu_dtype=mxu_dtype)

    # 3x3 smoothing convs (direct conv kernel, no im2col).
    P5 = conv3x3_same_pallas(P5, params["P5_2_w"], params["P5_2_b"], mxu_dtype=mxu_dtype)
    P4 = conv3x3_same_pallas(P4, params["P4_2_w"], params["P4_2_b"], mxu_dtype=mxu_dtype)
    P3 = conv3x3_same_pallas(P3, params["P3_2_w"], params["P3_2_b"], mxu_dtype=mxu_dtype)

    # P6 / P7 heads (tiny stride-2 convs).
    src6 = P5 if use_p5 else C5
    P6 = conv3x3_s2_pallas(src6, params["P6_w"], params["P6_b"], mxu_dtype=mxu_dtype)
    P7 = conv3x3_s2_pallas(P6, params["P7_w"], params["P7_b"],
                           relu_input=True, mxu_dtype=mxu_dtype)  # Sequential(ReLU, Conv)
    return [P3, P4, P5, P6, P7]


# ---------------------------------------------------------------------------
# Pure-JAX reference (lax.conv) for correctness checking
# ---------------------------------------------------------------------------
def _conv_ref(x, w, b, stride, padding, relu_in=False):
    if relu_in:
        x = jax.nn.relu(x)
    y = jax.lax.conv_general_dilated(
        x, w, window_strides=(stride, stride),
        padding=((padding, padding), (padding, padding)),
        dimension_numbers=("NHWC", "HWIO", "NHWC"),
        precision=jax.lax.Precision.HIGHEST)
    return y + b


def retina_fpn_reference(params, inputs, use_p5=True):
    C3, C4, C5 = inputs
    P5 = _conv_ref(C5, params["P5_1_w"], params["P5_1_b"], 1, 0)
    P4 = _conv_ref(C4, params["P4_1_w"], params["P4_1_b"], 1, 0)
    P4 = _nearest_resize(P5, P4.shape[1], P4.shape[2]) + P4
    P3 = _conv_ref(C3, params["P3_1_w"], params["P3_1_b"], 1, 0)
    P3 = _nearest_resize(P4, P3.shape[1], P3.shape[2]) + P3
    P5 = _conv_ref(P5, params["P5_2_w"], params["P5_2_b"], 1, 1)
    P4 = _conv_ref(P4, params["P4_2_w"], params["P4_2_b"], 1, 1)
    P3 = _conv_ref(P3, params["P3_2_w"], params["P3_2_b"], 1, 1)
    P6 = _conv_ref(P5 if use_p5 else C5, params["P6_w"], params["P6_b"], 2, 1)
    P7 = _conv_ref(P6, params["P7_w"], params["P7_b"], 2, 1, relu_in=True)
    return [P3, P4, P5, P6, P7]


if __name__ == "__main__":
    key = jax.random.PRNGKey(0)
    kp, k3, k4, k5 = jax.random.split(key, 4)

    N = 2
    C3_in, C4_in, C5_in, planes = 16, 32, 64, 8
    # NHWC inputs (small, but big enough that the P3 lateral exercises >1 M tile
    # when used with the 512-row default tile).
    C3 = jax.random.normal(k3, (N, 16, 32, C3_in), jnp.float32)
    C4 = jax.random.normal(k4, (N, 8, 16, C4_in), jnp.float32)
    C5 = jax.random.normal(k5, (N, 4, 8, C5_in), jnp.float32)

    params = init_params(kp, C3_in, C4_in, C5_in, planes, use_p5=True)

    # Keep MXU operands in f32 to match the PyTorch module bit-for-bit-ish.
    # On v6e/v7x, pass mxu_dtype=jnp.bfloat16 for the native-bf16 MXU path.
    outs = retina_fpn_forward(params, [C3, C4, C5], use_p5=True,
                              mxu_dtype=jnp.float32)
    outs = jax.block_until_ready(outs)

    expected = [(N, 16, 32, planes), (N, 8, 16, planes), (N, 4, 8, planes),
                (N, 2, 4, planes), (N, 1, 2, planes)]
    assert [tuple(o.shape) for o in outs] == expected, [o.shape for o in outs]

    refs = retina_fpn_reference(params, [C3, C4, C5], use_p5=True)
    refs = jax.block_until_ready(refs)
    for name, o, r in zip(["P3", "P4", "P5", "P6", "P7"], outs, refs):
        err = float(jnp.max(jnp.abs(o - r)))
        assert err < 1e-4, (name, err)

    print("KERNEL_OK")
</pallas_src>

<mosaic_0001>
module attributes {stable_mosaic.version = 11 : i64} {
  func.func @_mm_kernel(%arg0: i32, %arg1: memref<64x64xf32, #tpu.memory_space<vmem>>, %arg2: memref<64x8xf32, #tpu.memory_space<vmem>>, %arg3: memref<1x8xf32, #tpu.memory_space<vmem>>, %arg4: memref<64x8xf32, #tpu.memory_space<vmem>>) attributes {dimension_semantics = [#tpu.dimension_semantics<arbitrary>], iteration_bounds = array<i64: 1>, scalar_prefetch = 0 : i64, scratch_operands = 0 : i64, tpu.core_type = #tpu.core_type<tc>, window_params = [{transform_indices = @transform_0, window_bounds = array<i64: 64, 64>}, {pipeline_mode = #tpu.pipeline_mode<synchronous>, transform_indices = @transform_1, window_bounds = array<i64: 64, 8>}, {pipeline_mode = #tpu.pipeline_mode<synchronous>, transform_indices = @transform_2, window_bounds = array<i64: 1, 8>}, {transform_indices = @transform_3, window_bounds = array<i64: 64, 8>}]} {
    %c0 = arith.constant 0 : index
    %c0_0 = arith.constant 0 : index
    %0 = vector.load %arg1[%c0, %c0_0] : memref<64x64xf32, #tpu.memory_space<vmem>>, vector<64x64xf32>
    %c0_1 = arith.constant 0 : index
    %c0_2 = arith.constant 0 : index
    %1 = vector.load %arg2[%c0_1, %c0_2] : memref<64x8xf32, #tpu.memory_space<vmem>>, vector<64x8xf32>
    %cst = arith.constant dense<0.000000e+00> : vector<64x8xf32>
    %2 = tpu.matmul %0, %1, %cst {dimension_numbers = #tpu.dot_dimension_numbers<[1], [0], [0], [1], [0, 0, 1, 1], [], []>} : vector<64x64xf32>, vector<64x8xf32>, vector<64x8xf32> -> vector<64x8xf32>
    %c0_3 = arith.constant 0 : index
    %c0_4 = arith.constant 0 : index
    %3 = vector.load %arg3[%c0_3, %c0_4] : memref<1x8xf32, #tpu.memory_space<vmem>>, vector<1x8xf32>
    %4 = vector.broadcast %3 : vector<1x8xf32> to vector<64x8xf32>
    %5 = arith.addf %2, %4 : vector<64x8xf32>
    %c0_5 = arith.constant 0 : index
    %c0_6 = arith.constant 0 : index
    %6 = vector.load %arg4[%c0_5, %c0_6] : memref<64x8xf32, #tpu.memory_space<vmem>>, vector<64x8xf32>
    tpu.vector_store %arg4[%c0_5, %c0_6], %5 {strides = array<i32>} : memref<64x8xf32, #tpu.memory_space<vmem>>, vector<64x8xf32>,
    return
  }
  func.func @transform_0(%arg0: i32) -> (i32, i32) {
    %c0_i32 = arith.constant 0 : i32
    %c0_i32_0 = arith.constant 0 : i32
    return %arg0, %c0_i32 : i32, i32
  }
  func.func @transform_1(%arg0: i32) -> (i32, i32) {
    %c0_i32 = arith.constant 0 : i32
    %c0_i32_0 = arith.constant 0 : i32
    %c0_i32_1 = arith.constant 0 : i32
    return %c0_i32, %c0_i32_0 : i32, i32
  }
  func.func @transform_2(%arg0: i32) -> (i32, i32) {
    %c0_i32 = arith.constant 0 : i32
    %c0_i32_0 = arith.constant 0 : i32
    %c0_i32_1 = arith.constant 0 : i32
    return %c0_i32, %c0_i32_0 : i32, i32
  }
  func.func @transform_3(%arg0: i32) -> (i32, i32) {
    %c0_i32 = arith.constant 0 : i32
    %c0_i32_0 = arith.constant 0 : i32
    return %arg0, %c0_i32 : i32, i32
  }
}

</mosaic_0001>

<llo_original>
// kernel: tpu_custom_call.1
$region0: #{tpu_custom_call.1}
  #allocation0 [shape = 'u32[]', space=smem, size = 0x4, offset = 0x4, fixed_abs, tag = 'smem constant byte address 0x4 - core index']
  #allocation1 [shape = 'u32[144,128]{1,0:T(1,128)}', space=vmem, size = 0x12000, scoped, tag = 'internal scratch']
  %s0 = inlined_call_operand.vmem [shape: f32[64,64], index: 0, kind: input, shape index: {}]
  %s1 = inlined_call_operand.vmem [shape: f32[64,8], index: 1, kind: input, shape index: {}]
  %s2 = inlined_call_operand.vmem [shape: f32[1,8], index: 2, kind: input, shape index: {}]
  %s3 = inlined_call_operand.vmem [shape: f32[64,8], index: 3, kind: output, shape index: {}]
  %s4 = sld [smem:[#allocation0]]
  $region22: #{tpu_custom_call.1} parent=0
    _
  %s6 = ssub.s32 1, %s4
  %s7 = scalar_select 0, %s6, %s4
  // Predicated region
  $region2: #{tpu_custom_call.1} parent=0 // pred_check
    _
  $region3: #{tpu_custom_call.1} parent=0 // pred_check_branch
    %9 = sbr.rel (0) target = $region5
  $region4: #{tpu_custom_call.1} parent=0 // pred_region
    _
  $region5: #{tpu_custom_call.1} parent=0 // pred_fallthru
    _
  // Predicated region
  $region6: #{tpu_custom_call.1} parent=0 // pred_check
    _
  $region7: #{tpu_custom_call.1} parent=0 // pred_check_branch
    %11 = sbr.rel (0) target = $region9
  $region8: #{tpu_custom_call.1} parent=0 // pred_region
    _
  $region9: #{tpu_custom_call.1} parent=0 // pred_fallthru
    _
  // Predicated region
  $region10: #{tpu_custom_call.1} parent=0 // pred_check
    _
  $region11: #{tpu_custom_call.1} parent=0 // pred_check_branch
    %13 = sbr.rel (0) target = $region13
  $region12: #{tpu_custom_call.1} parent=0 // pred_region
    _
  $region13: #{tpu_custom_call.1} parent=0 // pred_fallthru
    _
  %v14 = vld [vmem:[%s0] sm:$0xff]
  %v15 = vld [vmem:[%s0 + $0x8] sm:$0xff]
  %v16 = vld [vmem:[%s0 + $0x10] sm:$0xff]
  %v17 = vld [vmem:[%s0 + $0x18] sm:$0xff]
  %v18 = vld [vmem:[%s0 + $0x20] sm:$0xff]
  %v19 = vld [vmem:[%s0 + $0x28] sm:$0xff]
  %v20 = vld [vmem:[%s0 + $0x30] sm:$0xff]
  %v21 = vld [vmem:[%s0 + $0x38] sm:$0xff]
  %v22 = vld [vmem:[%s1] sm:$0xff]
  %v23 = vld [vmem:[%s1 + $0x8] sm:$0xff]
  %v24 = vld [vmem:[%s1 + $0x10] sm:$0xff]
  %v25 = vld [vmem:[%s1 + $0x18] sm:$0xff]
  %v26 = vld [vmem:[%s1 + $0x20] sm:$0xff]
  %v27 = vld [vmem:[%s1 + $0x28] sm:$0xff]
  %v28 = vld [vmem:[%s1 + $0x30] sm:$0xff]
  %v29 = vld [vmem:[%s1 + $0x38] sm:$0xff]
  %v30 = vld [vmem:[%s2] sm:$0x1]
  %v32 = vlaneseq
  %v33 = vshrl.u32 %v32, 7
  %v34 = vsub.s32 0, %v33
  %v35 = vrot.slane %v30, %v34
  %vm37 = vcmask 523264
  %v39 = vsel %vm37, %v14, 0
  %v42 = vsel %vm37, %v15, 0
  %v45 = vsel %vm37, %v16, 0
  %v48 = vsel %vm37, %v17, 0
  %v51 = vsel %vm37, %v18, 0
  %v54 = vsel %vm37, %v19, 0
  %v57 = vsel %vm37, %v20, 0
  %v60 = vsel %vm37, %v21, 0
  %62 = vmatprep.subr.mxu0 0.0
  %63 = vmatpush1.msra.mxu0 %v22
  %64 = vmatprep.subr.mxu0 0.0
  %65 = vmatpush1.msra.mxu0 %v23
  %66 = vmatprep.subr.mxu0 0.0
  %67 = vmatpush1.msra.mxu0 %v24
  %68 = vmatprep.subr.mxu0 0.0
  %69 = vmatpush1.msra.mxu0 %v25
  %70 = vmatprep.subr.mxu0 0.0
  %71 = vmatpush1.msra.mxu0 %v26
  %72 = vmatprep.subr.mxu0 0.0
  %73 = vmatpush1.msra.mxu0 %v27
  %74 = vmatprep.subr.mxu0 0.0
  %75 = vmatpush1.msra.mxu0 %v28
  %76 = vmatprep.subr.mxu0 0.0
  %77 = vmatpush1.msra.mxu0 %v29
  %78 = vmatprep.subr.mxu0 0.0
  %79 = vmatpush1.msra.mxu0 0.0
  %80 = vmatprep.subr.mxu0 0.0
  %81 = vmatpush1.msra.mxu0 0.0
  %82 = vmatprep.subr.mxu0 0.0
  %83 = vmatpush1.msra.mxu0 0.0
  %84 = vmatprep.subr.mxu0 0.0
  %85 = vmatpush1.msra.mxu0 0.0
  %86 = vmatprep.subr.mxu0 0.0
  %87 = vmatpush1.msra.mxu0 0.0
  %88 = vmatprep.subr.mxu0 0.0
  %89 = vmatpush1.msra.mxu0 0.0
  %90 = vmatprep.subr.mxu0 0.0
  %91 = vmatpush1.msra.mxu0 0.0
  %92 = vmatprep.subr.mxu0 0.0
  %93 = vmatpush1.msra.mxu0 0.0
  %94 = vmatprep.subr.mxu0 0.0
  %95 = vmatpush1.msra.mxu0 0.0
  %96 = vmatprep.subr.mxu0 0.0
  %97 = vmatpush1.msra.mxu0 0.0
  %98 = vmatprep.subr.mxu0 0.0
  %99 = vmatpush1.msra.mxu0 0.0
  %100 = vmatprep.subr.mxu0 0.0
  %101 = vmatpush1.msra.mxu0 0.0
  %102 = vmatprep.subr.mxu0 0.0
  %103 = vmatpush1.msra.mxu0 0.0
  %104 = vmatprep.subr.mxu0 0.0
  %105 = vmatpush1.msra.mxu0 0.0
  %106 = vmatprep.subr.mxu0 0.0
  %107 = vmatpush1.msra.mxu0 0.0
  %108 = vmatprep.subr.mxu0 0.0
  %109 = vmatpush1.msra.mxu0 0.0
  %110 = vmatprep.subr.mxu0 0.0
  %111 = vmatpush1.msra.mxu0 0.0
  %112 = vmatprep.subr.mxu0 0.0
  %113 = vmatpush1.msra.mxu0 0.0
  %114 = vmatprep.subr.mxu0 0.0
  %115 = vmatpush1.msra.mxu0 0.0
  %116 = vmatprep.subr.mxu0 0.0
  %117 = vmatpush1.msra.mxu0 0.0
  %118 = vmatprep.subr.mxu0 0.0
  %119 = vmatpush1.msra.mxu0 0.0
  %120 = vmatprep.subr.mxu0 0.0
  %121 = vmatpush1.msra.mxu0 0.0
  %122 = vmatprep.subr.mxu0 0.0
  %123 = vmatpush1.msra.mxu0 0.0
  %124 = vmatprep.subr.mxu0 0.0
  %125 = vmatpush1.msra.mxu0 0.0
  %126 = vmatprep.mubr.f32.mxu0 0.0
  %127 = vmatmul.mubr.f32.gmra.mrb[0].mxu0 %v39
  %v128 = vpop.f32.mrb[0].mxu0
  %v129 = vadd.f32 %v35, %v128
  %v130 = vpop.f32.mrb[0].mxu0
  %131 = vmatprep.mubr.f32.mxu0 0.0
  %132 = vmatmul.mubr.f32.gmra.mrb[0].mxu0 %v42
  %v133 = vpop.f32.mrb[0].mxu0
  %v134 = vadd.f32 %v35, %v133
  %v135 = vpop.f32.mrb[0].mxu0
  %136 = vmatprep.mubr.f32.mxu0 0.0
  %137 = vmatmul.mubr.f32.gmra.mrb[0].mxu0 %v45
  %v138 = vpop.f32.mrb[0].mxu0
  %v139 = vadd.f32 %v35, %v138
  %v140 = vpop.f32.mrb[0].mxu0
  %141 = vmatprep.mubr.f32.mxu0 0.0
  %142 = vmatmul.mubr.f32.gmra.mrb[0].mxu0 %v48
  %v143 = vpop.f32.mrb[0].mxu0
  %v144 = vadd.f32 %v35, %v143
  %v145 = vpop.f32.mrb[0].mxu0
  %146 = vmatprep.mubr.f32.mxu0 0.0
  %147 = vmatmul.mubr.f32.gmra.mrb[0].mxu0 %v51
  %v148 = vpop.f32.mrb[0].mxu0
  %v149 = vadd.f32 %v35, %v148
  %v150 = vpop.f32.mrb[0].mxu0
  %151 = vmatprep.mubr.f32.mxu0 0.0
  %152 = vmatmul.mubr.f32.gmra.mrb[0].mxu0 %v54
  %v153 = vpop.f32.mrb[0].mxu0
  %v154 = vadd.f32 %v35, %v153
  %v155 = vpop.f32.mrb[0].mxu0
  %156 = vmatprep.mubr.f32.mxu0 0.0
  %157 = vmatmul.mubr.f32.gmra.mrb[0].mxu0 %v57
  %v158 = vpop.f32.mrb[0].mxu0
  %v159 = vadd.f32 %v35, %v158
  %v160 = vpop.f32.mrb[0].mxu0
  %161 = vmatprep.mubr.f32.mxu0 0.0
  %162 = vmatmul.mubr.f32.gmra.mrb[0].mxu0 %v60
  %v163 = vpop.f32.mrb[0].mxu0
  %v164 = vadd.f32 %v35, %v163
  %v165 = vpop.f32.mrb[0].mxu0
  %166 = vdwg.mxu0
  %vm167 = vcmask 64512
  %168 = vst.msk [vmem:[%s3] sm:$0xff] %vm167, %v129
  %169 = vst.msk [vmem:[%s3 + $0x8] sm:$0xff] %vm167, %v134
  %170 = vst.msk [vmem:[%s3 + $0x10] sm:$0xff] %vm167, %v139
  %171 = vst.msk [vmem:[%s3 + $0x18] sm:$0xff] %vm167, %v144
  %172 = vst.msk [vmem:[%s3 + $0x20] sm:$0xff] %vm167, %v149
  %173 = vst.msk [vmem:[%s3 + $0x28] sm:$0xff] %vm167, %v154
  %174 = vst.msk [vmem:[%s3 + $0x30] sm:$0xff] %vm167, %v159
  %175 = vst.msk [vmem:[%s3 + $0x38] sm:$0xff] %vm167, %v164
  // Predicated region
  $region14: #{tpu_custom_call.1} parent=0 // pred_check
    _
  $region15: #{tpu_custom_call.1} parent=0 // pred_check_branch
    %177 = sbr.rel (0) target = $region17
  $region16: #{tpu_custom_call.1} parent=0 // pred_region
    _
  $region17: #{tpu_custom_call.1} parent=0 // pred_fallthru
    _
  // Predicated region
  $region18: #{tpu_custom_call.1} parent=0 // pred_check
    _
  $region19: #{tpu_custom_call.1} parent=0 // pred_check_branch
    %179 = sbr.rel (0) target = $region21
  $region20: #{tpu_custom_call.1} parent=0 // pred_region
    _
  $region21: #{tpu_custom_call.1} parent=0 // pred_fallthru
    _

</llo_original>
